<compile_context>
chip_gen: v6e
topology: v6e:2x2x1
jax: 0.10.0
libtpu: 0.0.40
codegen_flags: <defaults>
</compile_context>

<pallas_src>
import math
import jax
import jax.numpy as jnp
from jax.experimental import pallas as pl
from jax.experimental.pallas import tpu as pltpu


# ---------------------------------------------------------------------------
# Parameter / buffer construction (plain JAX, deterministic)
# ---------------------------------------------------------------------------
def positional_encoding(q_len: int, d_model: int, normalize: bool = True):
    """sin/cos positional encoding, matching PositionalEncoding() in Embed.py."""
    position = jnp.arange(q_len, dtype=jnp.float32)[:, None]                 # [q_len, 1]
    div_term = jnp.exp(
        jnp.arange(0, d_model, 2, dtype=jnp.float32) * -(math.log(10000.0) / d_model)
    )                                                                         # [d_model//2]
    pe = jnp.zeros((q_len, d_model), dtype=jnp.float32)
    pe = pe.at[:, 0::2].set(jnp.sin(position * div_term))
    pe = pe.at[:, 1::2].set(jnp.cos(position * div_term))
    if normalize:
        pe = pe - pe.mean()
        pe = pe / (pe.std(ddof=1) * 10.0)   # torch.std is unbiased (ddof=1)
    return pe


def init_linear_params(key, in_features: int, out_features: int):
    """Deterministic nn.Linear-style init: U(-1/sqrt(in), 1/sqrt(in))."""
    kw, kb = jax.random.split(key)
    bound = 1.0 / math.sqrt(in_features)
    # PyTorch stores weight as [out, in]; we keep [in, out] for the matmul.
    w = jax.random.uniform(kw, (in_features, out_features), jnp.float32, -bound, bound)
    b = jax.random.uniform(kb, (out_features,), jnp.float32, -bound, bound)
    return w, b


# ---------------------------------------------------------------------------
# Pallas kernel: TB rows of the flattened (B*n_vars) axis per grid step.
#   - unfold the L axis into P patches in-kernel (lane slices, sublane concat)
#   - ONE MXU matmul (P*TB, patch_len) @ (patch_len, d_model), f32 accumulate
#   - add (pos + bias) and store a lane-dense (TB, P*d_model) slab
# ---------------------------------------------------------------------------
def _make_patch_embed_kernel(num_patches: int, patch_len: int, stride: int, d_model: int):
    def kernel(x_ref, w_ref, posb_ref, o_ref):
        # x_ref   : (TB, L)                       input rows (f32 or bf16)
        # w_ref   : (patch_len, d_model)          value-embedding weight
        # posb_ref: (num_patches, d_model) f32    sincos pos-emb with bias folded in
        # o_ref   : (TB, num_patches * d_model)   lane-dense output slab (f32)
        x = x_ref[...]
        tb = x.shape[0]

        # In-kernel unfold: stack the P patch windows along the sublane axis
        # (patch-major), so a single MXU matmul covers all TB*P patch rows.
        xb = jnp.concatenate(
            [x[:, p * stride: p * stride + patch_len] for p in range(num_patches)],
            axis=0)                                                # (P*TB, patch_len)

        y = jnp.dot(xb, w_ref[...],
                    preferred_element_type=jnp.float32)            # (P*TB, d_model) f32

        posb = posb_ref[...]                                       # (P, d_model) f32
        # Re-interleave to row-major (row, patch) ordering as lane-concatenated
        # chunks: out[i, p*d_model:(p+1)*d_model] = y[p*TB + i, :] + posb[p, :]
        chunks = [y[p * tb:(p + 1) * tb, :] + posb[p:p + 1, :]
                  for p in range(num_patches)]
        o_ref[...] = jnp.concatenate(chunks, axis=1).astype(o_ref.dtype)

    return kernel


def patch_embedding_forward(x, w, b, pos, *, patch_len: int, stride: int,
                            compute_dtype=jnp.float32, block_rows=None):
    """x: [B, n_vars, L] float32.  Returns ([B*n_vars, P, d_model] f32, n_vars)."""
    B, n_vars, L = x.shape
    pl_in, d_model = w.shape
    assert pl_in == patch_len
    P = (L - patch_len) // stride + 1
    assert pos.shape[0] >= P, "positional buffer shorter than num_patches"

    BN = B * n_vars
    x_rows = x.reshape(BN, L).astype(compute_dtype)      # free reshape, no unfold in HBM
    w_c = w.astype(compute_dtype)
    # Fold the linear bias into the positional buffer (single epilogue add, f32).
    posb = (pos[:P, :] + b[None, :]).astype(jnp.float32)

    # ---- pick the row-block size TB -------------------------------------
    if block_rows is None:
        itemsize = jnp.dtype(compute_dtype).itemsize
        # double-buffered input + output streams per row (output is f32)
        bytes_per_row = 2 * (L * itemsize + P * d_model * 4)
        tb = min(512, max(16, (8 * 1024 * 1024) // max(bytes_per_row, 1)))
        tb = max(16, (tb // 16) * 16)
        # keep >= 2 parallel grid steps when there are enough rows (v7x: 2 TCs)
        while tb > 16 and -(-BN // tb) < 2:
            tb = max(16, (tb // 2 // 16) * 16)
        block_rows = tb
    TB = block_rows

    n_blocks = -(-BN // TB)
    BN_pad = n_blocks * TB
    if BN_pad != BN:
        x_rows = jnp.pad(x_rows, ((0, BN_pad - BN), (0, 0)))

    kernel = _make_patch_embed_kernel(P, patch_len, stride, d_model)

    out2d = pl.pallas_call(
        kernel,
        out_shape=jax.ShapeDtypeStruct((BN_pad, P * d_model), jnp.float32),
        grid_spec=pltpu.PrefetchScalarGridSpec(
            num_scalar_prefetch=0,
            grid=(n_blocks,),
            in_specs=[
                pl.BlockSpec((TB, L), lambda i: (i, 0)),
                pl.BlockSpec((patch_len, d_model), lambda i: (0, 0)),
                pl.BlockSpec((P, d_model), lambda i: (0, 0)),
            ],
            out_specs=pl.BlockSpec((TB, P * d_model), lambda i: (i, 0)),
        ),
        compiler_params=pltpu.CompilerParams(
            dimension_semantics=("parallel",),
            vmem_limit_bytes=32 * 1024 * 1024,
        ),
    )(x_rows, w_c, posb)
    # Note: if DMA latency is still exposed for very small per-step work, the
    # x input spec can additionally use pipeline_mode=pl.Buffered(3).

    out = out2d[:BN].reshape(BN, P, d_model)   # free row-major reshape
    return out, n_vars


# ---------------------------------------------------------------------------
# Reference (pure JAX) for sanity checking
# ---------------------------------------------------------------------------
def patch_embedding_reference(x, w, b, pos, *, patch_len, stride):
    B, n_vars, L = x.shape
    num_patches = (L - patch_len) // stride + 1
    patch_idx = stride * jnp.arange(num_patches)[:, None] + jnp.arange(patch_len)[None, :]
    xp = x[:, :, patch_idx]                                       # [B, C, P, pl]
    y = jnp.einsum("bcpk,kd->bcpd", xp, w) + b                    # value embedding
    y = y.reshape(B * n_vars, num_patches, -1)
    y = y + pos[:num_patches][None, :, :]
    return y, n_vars


if __name__ == "__main__":
    # Small shapes consistent with the module's forward.
    B, n_vars, L = 2, 4, 16
    patch_len, stride = 8, 4
    d_model = 32
    seq_len = 16          # q_len capacity of the positional-embedding buffer

    key = jax.random.PRNGKey(0)
    kx, kp = jax.random.split(key)
    x = jax.random.normal(kx, (B, n_vars, L), dtype=jnp.float32)

    w, b = init_linear_params(kp, patch_len, d_model)
    pos = positional_encoding(seq_len, d_model, normalize=True)   # 'sincos' buffer

    ref, _ = patch_embedding_reference(x, w, b, pos, patch_len=patch_len, stride=stride)

    # f32 path (exact check)
    out, nv = patch_embedding_forward(x, w, b, pos, patch_len=patch_len, stride=stride)
    out = jax.block_until_ready(out)
    assert out.shape == ref.shape
    assert jnp.allclose(out, ref, atol=1e-5, rtol=1e-5), "mismatch vs JAX reference (f32)"
    assert nv == n_vars

    # bf16 MXU-input path (v6e/v7x) — f32 accumulation/epilogue, relaxed tolerance
    out_bf16, _ = patch_embedding_forward(
        x, w, b, pos, patch_len=patch_len, stride=stride, compute_dtype=jnp.bfloat16)
    out_bf16 = jax.block_until_ready(out_bf16)
    assert out_bf16.shape == ref.shape
    assert jnp.allclose(out_bf16, ref, atol=5e-2, rtol=5e-2), "mismatch vs JAX reference (bf16)"

    print("KERNEL_OK")
</pallas_src>

<mosaic_0001>
module attributes {stable_mosaic.version = 11 : i64} {
  func.func @kernel(%arg0: i32, %arg1: memref<16x16xf32, #tpu.memory_space<vmem>>, %arg2: memref<8x32xf32, #tpu.memory_space<vmem>>, %arg3: memref<3x32xf32, #tpu.memory_space<vmem>>, %arg4: memref<16x96xf32, #tpu.memory_space<vmem>>) attributes {dimension_semantics = [#tpu.dimension_semantics<parallel>], iteration_bounds = array<i64: 1>, scalar_prefetch = 0 : i64, scratch_operands = 0 : i64, tpu.core_type = #tpu.core_type<tc>, window_params = [{transform_indices = @transform_0, window_bounds = array<i64: 16, 16>}, {pipeline_mode = #tpu.pipeline_mode<synchronous>, transform_indices = @transform_1, window_bounds = array<i64: 8, 32>}, {pipeline_mode = #tpu.pipeline_mode<synchronous>, transform_indices = @transform_2, window_bounds = array<i64: 3, 32>}, {transform_indices = @transform_3, window_bounds = array<i64: 16, 96>}]} {
    %c0 = arith.constant 0 : index
    %c0_0 = arith.constant 0 : index
    %0 = vector.load %arg1[%c0, %c0_0] : memref<16x16xf32, #tpu.memory_space<vmem>>, vector<16x16xf32>
    %1 = vector.extract_strided_slice %0 {offsets = [0, 0], sizes = [16, 8], strides = [1, 1]} : vector<16x16xf32> to vector<16x8xf32>
    %2 = vector.extract_strided_slice %0 {offsets = [0, 4], sizes = [16, 8], strides = [1, 1]} : vector<16x16xf32> to vector<16x8xf32>
    %3 = vector.extract_strided_slice %0 {offsets = [0, 8], sizes = [16, 8], strides = [1, 1]} : vector<16x16xf32> to vector<16x8xf32>
    %4 = tpu.concatenate %1, %2, %3 in 0 : vector<16x8xf32>, vector<16x8xf32>, vector<16x8xf32> -> vector<48x8xf32>
    %c0_1 = arith.constant 0 : index
    %c0_2 = arith.constant 0 : index
    %5 = vector.load %arg2[%c0_1, %c0_2] : memref<8x32xf32, #tpu.memory_space<vmem>>, vector<8x32xf32>
    %cst = arith.constant dense<0.000000e+00> : vector<48x32xf32>
    %6 = tpu.matmul %4, %5, %cst {dimension_numbers = #tpu.dot_dimension_numbers<[1], [0], [0], [1], [0, 0, 1, 1], [], []>} : vector<48x8xf32>, vector<8x32xf32>, vector<48x32xf32> -> vector<48x32xf32>
    %c0_3 = arith.constant 0 : index
    %c0_4 = arith.constant 0 : index
    %7 = vector.load %arg3[%c0_3, %c0_4] : memref<3x32xf32, #tpu.memory_space<vmem>>, vector<3x32xf32>
    %8 = vector.extract_strided_slice %6 {offsets = [0, 0], sizes = [16, 32], strides = [1, 1]} : vector<48x32xf32> to vector<16x32xf32>
    %9 = vector.extract_strided_slice %7 {offsets = [0, 0], sizes = [1, 32], strides = [1, 1]} : vector<3x32xf32> to vector<1x32xf32>
    %10 = vector.broadcast %9 : vector<1x32xf32> to vector<16x32xf32>
    %11 = arith.addf %8, %10 : vector<16x32xf32>
    %12 = vector.extract_strided_slice %6 {offsets = [16, 0], sizes = [16, 32], strides = [1, 1]} : vector<48x32xf32> to vector<16x32xf32>
    %13 = vector.extract_strided_slice %7 {offsets = [1, 0], sizes = [1, 32], strides = [1, 1]} : vector<3x32xf32> to vector<1x32xf32>
    %14 = vector.broadcast %13 : vector<1x32xf32> to vector<16x32xf32>
    %15 = arith.addf %12, %14 : vector<16x32xf32>
    %16 = vector.extract_strided_slice %6 {offsets = [32, 0], sizes = [16, 32], strides = [1, 1]} : vector<48x32xf32> to vector<16x32xf32>
    %17 = vector.extract_strided_slice %7 {offsets = [2, 0], sizes = [1, 32], strides = [1, 1]} : vector<3x32xf32> to vector<1x32xf32>
    %18 = vector.broadcast %17 : vector<1x32xf32> to vector<16x32xf32>
    %19 = arith.addf %16, %18 : vector<16x32xf32>
    %20 = tpu.concatenate %11, %15, %19 in 1 : vector<16x32xf32>, vector<16x32xf32>, vector<16x32xf32> -> vector<16x96xf32>
    %c0_5 = arith.constant 0 : index
    %c0_6 = arith.constant 0 : index
    %21 = vector.load %arg4[%c0_5, %c0_6] : memref<16x96xf32, #tpu.memory_space<vmem>>, vector<16x96xf32>
    tpu.vector_store %arg4[%c0_5, %c0_6], %20 {strides = array<i32>} : memref<16x96xf32, #tpu.memory_space<vmem>>, vector<16x96xf32>,
    return
  }
  func.func @transform_0(%arg0: i32) -> (i32, i32) {
    %c0_i32 = arith.constant 0 : i32
    %c0_i32_0 = arith.constant 0 : i32
    return %arg0, %c0_i32 : i32, i32
  }
  func.func @transform_1(%arg0: i32) -> (i32, i32) {
    %c0_i32 = arith.constant 0 : i32
    %c0_i32_0 = arith.constant 0 : i32
    %c0_i32_1 = arith.constant 0 : i32
    return %c0_i32, %c0_i32_0 : i32, i32
  }
  func.func @transform_2(%arg0: i32) -> (i32, i32) {
    %c0_i32 = arith.constant 0 : i32
    %c0_i32_0 = arith.constant 0 : i32
    %c0_i32_1 = arith.constant 0 : i32
    return %c0_i32, %c0_i32_0 : i32, i32
  }
  func.func @transform_3(%arg0: i32) -> (i32, i32) {
    %c0_i32 = arith.constant 0 : i32
    %c0_i32_0 = arith.constant 0 : i32
    return %arg0, %c0_i32 : i32, i32
  }
}

</mosaic_0001>

<llo_original>
// kernel: tpu_custom_call.1
$region0: #{tpu_custom_call.1}
  #allocation0 [shape = 'u32[]', space=smem, size = 0x4, offset = 0x4, fixed_abs, tag = 'smem constant byte address 0x4 - core index']
  #allocation1 [shape = 'u32[144,128]{1,0:T(1,128)}', space=vmem, size = 0x12000, scoped, tag = 'internal scratch']
  %s0 = inlined_call_operand.hbm [shape: f32[16,16], index: 0, kind: input, shape index: {}]
  %s1 = inlined_call_operand.hbm [shape: f32[8,32], index: 1, kind: input, shape index: {}]
  %s2 = inlined_call_operand.hbm [shape: f32[3,32], index: 2, kind: input, shape index: {}]
  %s3 = inlined_call_operand.hbm [shape: f32[16,96], index: 3, kind: output, shape index: {}]
  %s4 = sld [smem:[#allocation0]]
  $region34: #{tpu_custom_call.1} parent=0
    _
  %s6 = ssub.s32 1, %s4
  %s7 = scalar_select 0, %s6, %s4
  $region1: #{tpu_custom_call.1} parent=0
    #allocation2 [shape = 'u8[8192]{0}', space=vmem, size = 0x2000, scoped, tag = 'input window, operand 0, single buffered']
    #allocation3 [shape = 's32[1]{0}', space=sflag, size = 0x4, scoped, tag = 'scoped memory for tpu_custom_call.1']
    #allocation4 [shape = 's32[1]{0}', space=sflag, size = 0x4, scoped, tag = 'scoped memory for tpu_custom_call.1']
    #allocation5 [shape = 'u8[4096]{0}', space=vmem, size = 0x1000, scoped, tag = 'input window, operand 1, single buffered']
    #allocation6 [shape = 's32[1]{0}', space=sflag, size = 0x4, scoped, tag = 'scoped memory for tpu_custom_call.1']
    #allocation7 [shape = 'u8[2048]{0}', space=vmem, size = 0x800, scoped, tag = 'input window, operand 2, single buffered']
    #allocation8 [shape = 'u8[8192]{0}', space=vmem, size = 0x2000, scoped, tag = 'output window, operand 0, single buffered']
    %8 = vsyncpa [#allocation3], 0
    %9 = vsyncpa [#allocation6], 0
    %10 = vsyncpa [#allocation4], 0
    // Predicated region
    $region2: #{tpu_custom_call.1} parent=1 // pred_check
      _
    $region3: #{tpu_custom_call.1} parent=1 // pred_check_branch
      %12 = sbr.rel (0) target = $region5
    $region4: #{tpu_custom_call.1} parent=1 // pred_region
      %s14 = ssub.s32 256, 256
      %15 = vsyncadd [#allocation3], %s14
      %s16 = sshll.u32 [#allocation2], 4
      %s17 = int_to_ptr.vmem [resolvable:$true] %s16
      %22 = dma.hbm_to_vmem [thread:$0]  %s0, 256, %s17, [#allocation3], 128, 128, 8
    $region5: #{tpu_custom_call.1} parent=1 // pred_fallthru
      _
    // Predicated region
    $region6: #{tpu_custom_call.1} parent=1 // pred_check
      _
    $region7: #{tpu_custom_call.1} parent=1 // pred_check_branch
      %24 = sbr.rel (0) target = $region9
    $region8: #{tpu_custom_call.1} parent=1 // pred_region
      %s26 = ssub.s32 128, 128
      %27 = vsyncadd [#allocation6], %s26
      %s29 = sshll.u32 [#allocation5], 4
      %s30 = int_to_ptr.vmem [resolvable:$true] %s29
      %32 = dma.hbm_to_vmem [thread:$0]  %s1, 128, %s30, [#allocation6]
    $region9: #{tpu_custom_call.1} parent=1 // pred_fallthru
      _
    // Predicated region
    $region10: #{tpu_custom_call.1} parent=1 // pred_check
      _
    $region11: #{tpu_custom_call.1} parent=1 // pred_check_branch
      %34 = sbr.rel (0) target = $region13
    $region12: #{tpu_custom_call.1} parent=1 // pred_region
      %s36 = ssub.s32 64, 64
      %37 = vsyncadd [#allocation6], %s36
      %s39 = sshll.u32 [#allocation7], 4
      %s40 = int_to_ptr.vmem [resolvable:$true] %s39
      %42 = dma.hbm_to_vmem [thread:$0]  %s2, 64, %s40, [#allocation6]
    $region13: #{tpu_custom_call.1} parent=1 // pred_fallthru
      _
    // Predicated region
    $region14: #{tpu_custom_call.1} parent=1 // pred_check
      _
    $region15: #{tpu_custom_call.1} parent=1 // pred_check_branch
      %44 = sbr.rel (0) target = $region17
    $region16: #{tpu_custom_call.1} parent=1 // pred_region
      %45 = dma.done [#allocation3], 256
    $region17: #{tpu_custom_call.1} parent=1 // pred_fallthru
      _
    // Predicated region
    $region18: #{tpu_custom_call.1} parent=1 // pred_check
      _
    $region19: #{tpu_custom_call.1} parent=1 // pred_check_branch
      %47 = sbr.rel (0) target = $region21
    $region20: #{tpu_custom_call.1} parent=1 // pred_region
      %48 = dma.done [#allocation6], 128
    $region21: #{tpu_custom_call.1} parent=1 // pred_fallthru
      _
    // Predicated region
    $region22: #{tpu_custom_call.1} parent=1 // pred_check
      _
    $region23: #{tpu_custom_call.1} parent=1 // pred_check_branch
      %50 = sbr.rel (0) target = $region25
    $region24: #{tpu_custom_call.1} parent=1 // pred_region
      %51 = dma.done [#allocation6], 64
    $region25: #{tpu_custom_call.1} parent=1 // pred_fallthru
      _
    %v52 = vld [vmem:[#allocation2] sm:$0xff]
    %v53 = vld [vmem:[#allocation2 + $0x8] sm:$0xff]
    %56 = vrot.lane.b32.xlu0 %v52, 124
    %v57 = vpop.permute.xlu0 %56
    %58 = vrot.lane.b32.xlu0 %v53, 124
    %v59 = vpop.permute.xlu0 %58
    %60 = vrot.lane.b32.xlu0 %v52, 120
    %v61 = vpop.permute.xlu0 %60
    %62 = vrot.lane.b32.xlu0 %v53, 120
    %v63 = vpop.permute.xlu0 %62
    %v64 = vld [vmem:[#allocation5] sm:$0xff]
    %vm65 = vcmask 64512
    %v66 = vsel %vm65, %v52, 0
    %v68 = vsel %vm65, %v53, 0
    %v70 = vsel %vm65, %v57, 0
    %v72 = vsel %vm65, %v59, 0
    %v74 = vsel %vm65, %v61, 0
    %v76 = vsel %vm65, %v63, 0
    %78 = vmatprep.subr.mxu0 0.0
    %79 = vmatpush1.msra.mxu0 0.0
    %80 = vmatprep.subr.mxu0 0.0
    %81 = vmatpush1.msra.mxu0 0.0
    %82 = vmatprep.subr.mxu0 0.0
    %83 = vmatpush1.msra.mxu0 0.0
    %84 = vmatprep.subr.mxu0 0.0
    %85 = vmatpush1.msra.mxu0 0.0
    %86 = vmatprep.subr.mxu0 0.0
    %87 = vmatpush1.msra.mxu0 0.0
    %88 = vmatprep.subr.mxu0 0.0
    %89 = vmatpush1.msra.mxu0 0.0
    %90 = vmatprep.subr.mxu0 0.0
    %91 = vmatpush1.msra.mxu0 0.0
    %92 = vmatprep.subr.mxu0 0.0
    %93 = vmatpush1.msra.mxu0 0.0
    %94 = vmatprep.subr.mxu0 0.0
    %95 = vmatpush1.msra.mxu0 0.0
    %96 = vmatprep.subr.mxu0 0.0
    %97 = vmatpush1.msra.mxu0 0.0
    %98 = vmatprep.subr.mxu0 0.0
    %99 = vmatpush1.msra.mxu0 0.0
    %100 = vmatprep.subr.mxu0 0.0
    %101 = vmatpush1.msra.mxu0 0.0
    %102 = vmatprep.subr.mxu0 0.0
    %103 = vmatpush1.msra.mxu0 0.0
    %104 = vmatprep.subr.mxu0 0.0
    %105 = vmatpush1.msra.mxu0 0.0
    %106 = vmatprep.subr.mxu0 0.0
    %107 = vmatpush1.msra.mxu0 0.0
    %108 = vmatprep.subr.mxu0 0.0
    %109 = vmatpush1.msra.mxu0 %v64
    %110 = vmatprep.subr.mxu0 0.0
    %111 = vmatpush2.msra.mxu0 0.0
    %112 = vmatprep.subr.mxu0 0.0
    %113 = vmatpush2.msra.mxu0 0.0
    %114 = vmatprep.subr.mxu0 0.0
    %115 = vmatpush2.msra.mxu0 0.0
    %116 = vmatprep.subr.mxu0 0.0
    %117 = vmatpush2.msra.mxu0 0.0
    %118 = vmatprep.subr.mxu0 0.0
    %119 = vmatpush2.msra.mxu0 0.0
    %120 = vmatprep.subr.mxu0 0.0
    %121 = vmatpush2.msra.mxu0 0.0
    %122 = vmatprep.subr.mxu0 0.0
    %123 = vmatpush2.msra.mxu0 0.0
    %124 = vmatprep.subr.mxu0 0.0
    %125 = vmatpush2.msra.mxu0 0.0
    %126 = vmatprep.subr.mxu0 0.0
    %127 = vmatpush2.msra.mxu0 0.0
    %128 = vmatprep.subr.mxu0 0.0
    %129 = vmatpush2.msra.mxu0 0.0
    %130 = vmatprep.subr.mxu0 0.0
    %131 = vmatpush2.msra.mxu0 0.0
    %132 = vmatprep.subr.mxu0 0.0
    %133 = vmatpush2.msra.mxu0 0.0
    %134 = vmatprep.subr.mxu0 0.0
    %135 = vmatpush2.msra.mxu0 0.0
    %136 = vmatprep.subr.mxu0 0.0
    %137 = vmatpush2.msra.mxu0 0.0
    %138 = vmatprep.subr.mxu0 0.0
    %139 = vmatpush2.msra.mxu0 0.0
    %140 = vmatprep.subr.mxu0 0.0
    %141 = vmatpush2.msra.mxu0 0.0
    %142 = vmatprep.mubr.f32.mxu0 0.0
    %143 = vmatmul.mubr.f32.gmra.mxu0 %v66
    %v144 = vpop.f32.mrf.mxu0
    %v145 = vadd.f32 0.0, %v144
    %v146 = vpop.f32.mrf.mxu0
    %147 = vmatprep.mubr.f32.mxu0 0.0
    %148 = vmatmul.mubr.f32.gmra.mxu0 %v68
    %v149 = vpop.f32.mrf.mxu0
    %v150 = vadd.f32 0.0, %v149
    %v151 = vpop.f32.mrf.mxu0
    %152 = vmatprep.mubr.f32.mxu0 0.0
    %153 = vmatmul.mubr.f32.gmra.mxu0 %v70
    %v154 = vpop.f32.mrf.mxu0
    %v155 = vadd.f32 0.0, %v154
    %v156 = vpop.f32.mrf.mxu0
    %157 = vmatprep.mubr.f32.mxu0 0.0
    %158 = vmatmul.mubr.f32.gmra.mxu0 %v72
    %v159 = vpop.f32.mrf.mxu0
    %v160 = vadd.f32 0.0, %v159
    %v161 = vpop.f32.mrf.mxu0
    %162 = vmatprep.mubr.f32.mxu0 0.0
    %163 = vmatmul.mubr.f32.gmra.mxu0 %v74
    %v164 = vpop.f32.mrf.mxu0
    %v165 = vadd.f32 0.0, %v164
    %v166 = vpop.f32.mrf.mxu0
    %167 = vmatprep.mubr.f32.mxu0 0.0
    %168 = vmatmul.mubr.f32.gmra.mxu0 %v76
    %v169 = vpop.f32.mrf.mxu0
    %v170 = vadd.f32 0.0, %v169
    %v171 = vpop.f32.mrf.mxu0
    %172 = vdwg.mxu0
    %v173 = vld [vmem:[#allocation7] sm:$0x7]
    %v174 = vlaneseq
    %v175 = vshrl.u32 %v174, 7
    %v176 = vsub.s32 0, %v175
    %v177 = vrot.slane %v173, %v176
    %v178 = vadd.f32 %v145, %v177
    %v179 = vadd.f32 %v150, %v177
    %v180 = vlaneseq
    %v181 = vshrl.u32 %v180, 7
    %v182 = vsub.s32 1, %v181
    %v183 = vrot.slane %v173, %v182
    %v184 = vadd.f32 %v155, %v183
    %v185 = vadd.f32 %v160, %v183
    %v186 = vlaneseq
    %v187 = vshrl.u32 %v186, 7
    %v188 = vsub.s32 2, %v187
    %v189 = vrot.slane %v173, %v188
    %v190 = vadd.f32 %v165, %v189
    %v191 = vadd.f32 %v170, %v189
    %194 = vrot.lane.b32.xlu0 %v184, 32
    %v195 = vpop.permute.xlu0 %194
    %196 = vrot.lane.b32.xlu0 %v185, 32
    %v197 = vpop.permute.xlu0 %196
    %202 = vrot.lane.b32.xlu0 %v190, 64
    %v203 = vpop.permute.xlu0 %202
    %204 = vrot.lane.b32.xlu0 %v191, 64
    %v205 = vpop.permute.xlu0 %204
    %vm208 = vcmask 261120
    %v209 = vsel %vm208, %v178, %v195
    %v210 = vsel %vm208, %v179, %v197
    %vm211 = vcmask 523264
    %v212 = vsel %vm211, %v209, %v203
    %v213 = vsel %vm211, %v210, %v205
    %vm214 = vcmask 785408
    %215 = vst.msk [vmem:[#allocation8] sm:$0xff] %vm214, %v212
    %216 = vst.msk [vmem:[#allocation8 + $0x8] sm:$0xff] %vm214, %v213
    // Predicated region
    $region26: #{tpu_custom_call.1} parent=1 // pred_check
      _
    $region27: #{tpu_custom_call.1} parent=1 // pred_check_branch
      %218 = sbr.rel (0) target = $region29
    $region28: #{tpu_custom_call.1} parent=1 // pred_region
      %s220 = ssub.s32 256, 256
      %221 = vsyncadd [#allocation4], %s220
      %s222 = sshll.u32 [#allocation8], 4
      %s223 = int_to_ptr.vmem [resolvable:$true] %s222
      %228 = dma.vmem_to_hbm [thread:$0]  %s223, 256, %s3, [#allocation4], 128, 128, 8
    $region29: #{tpu_custom_call.1} parent=1 // pred_fallthru
      _
    // Predicated region
    $region30: #{tpu_custom_call.1} parent=1 // pred_check
      _
    $region31: #{tpu_custom_call.1} parent=1 // pred_check_branch
      %230 = sbr.rel (0) target = $region33
    $region32: #{tpu_custom_call.1} parent=1 // pred_region
      %231 = dma.done [#allocation4], 256
    $region33: #{tpu_custom_call.1} parent=1 // pred_fallthru
      _
    %232 = vsyncpa [#allocation3], 1
    %233 = vsyncpa [#allocation6], 1
    %234 = vsyncpa [#allocation4], 1

</llo_original>
